<compile_context>
chip_gen: v7x
topology: tpu7x:2x2x1
jax: 0.10.0
libtpu: 0.0.40
codegen_flags: <defaults>
</compile_context>

<pallas_src>
import functools

import jax
import jax.numpy as jnp
from jax.experimental import pallas as pl
from jax.experimental.pallas import tpu as pltpu

F_PAD = 128     # conv output channels, zero-padded to a full lane width
O_PAD = 128     # kernel output lane width (real net_out_features sliced out)


# ----------------------------- Pallas kernel --------------------------------
def netsimple_kernel(patches_ref, wconv_ref, bconv_ref, wc_ref, bc_ref,
                     out_ref, acc_ref, *, inv_hw):
    """One (batch b, spatial tile s) grid step.

    patches_ref : [TILE_HW, C*9]  bf16   im2col'd rows of batch element b
    wconv_ref   : [C*9, F_PAD]    bf16   conv weight (zero-padded lanes)
    bconv_ref   : [1, F_PAD]      f32    conv bias (zero-padded lanes)
    wc_ref      : [1, F_PAD]      f32    folded (wfc @ whead)[:, 0], padded
    bc_ref      : [1, O_PAD]      f32    folded bias, broadcast over lanes
    out_ref     : [1, O_PAD]      f32    row b of the padded output
    acc_ref     : [1, F_PAD]      f32    per-batch running sum of ReLU(conv)
    """
    s = pl.program_id(1)

    @pl.when(s == 0)
    def _():
        acc_ref[...] = jnp.zeros_like(acc_ref)

    # conv-as-matmul on the MXU (bf16 in, f32 accumulate) + bias + ReLU.
    conv = jnp.dot(patches_ref[...], wconv_ref[...],
                   preferred_element_type=jnp.float32)          # [TILE_HW, F_PAD]
    conv = jnp.maximum(conv + bconv_ref[...], 0.0)

    # partial global-average-pool: accumulate the spatial sum for batch b.
    acc_ref[...] += jnp.sum(conv, axis=0, keepdims=True)        # [1, F_PAD]

    @pl.when(s == pl.num_programs(1) - 1)
    def _():
        pooled = acc_ref[...] * inv_hw                          # [1, F_PAD]
        # Folded backbone.fc + net_head projection (O == 1): VPU mul +
        # XLU lane-reduce keeps the MXU off the epilogue critical path.
        proj = jnp.sum(pooled * wc_ref[...], axis=-1, keepdims=True)   # [1, 1]
        out_ref[...] = (proj + bc_ref[...]).astype(out_ref.dtype)      # [1, O_PAD]


# ------------------------------- wrapper -------------------------------------
def im2col_3x3(x):
    """x: [B, C, H, W] NCHW -> patches [B, H*W, C*9], 'same' padding."""
    B, C, H, W = x.shape
    xp = jnp.pad(x, ((0, 0), (0, 0), (1, 1), (1, 1)))
    cols = []
    for dy in range(3):
        for dx in range(3):
            cols.append(xp[:, :, dy:dy + H, dx:dx + W])          # [B, C, H, W]
    p = jnp.stack(cols, axis=2)                                  # [B, C, 9, H, W]
    p = p.transpose(0, 3, 4, 1, 2)                               # [B, H, W, C, 9]
    return p.reshape(B, H * W, C * 9)


def netsimple_forward(x, params):
    """x: [B, C, H, W] float32 NCHW. Returns [B, net_out_features]."""
    B, C, H, W = x.shape
    HW = H * W
    CKK = C * 9

    O = params["whead"].shape[-1]
    assert O == 1, "VPU epilogue assumes net_out_features == 1"
    F = params["wconv"].shape[-1]
    assert F <= F_PAD

    # ---- prepare kernel operands (fold + pad + cast) -------------------------
    # fold backbone fc and net_head (no nonlinearity in between)
    wc = params["wfc"] @ params["whead"]                              # [F, O]
    bc = params["bfc"] @ params["whead"] + params["bhead"]            # [1, O]
    wc_row = jnp.zeros((1, F_PAD), jnp.float32).at[0, :F].set(wc[:, 0])
    bc_pad = jnp.broadcast_to(bc[:, :1], (1, O_PAD)).astype(jnp.float32)

    wconv_p = jnp.zeros((CKK, F_PAD), jnp.float32).at[:, :F].set(params["wconv"])
    wconv_p = wconv_p.astype(jnp.bfloat16)
    bconv_p = jnp.zeros((1, F_PAD), jnp.float32).at[:, :F].set(params["bconv"])

    patches = im2col_3x3(x).astype(jnp.bfloat16)                      # [B, HW, CKK]

    tile_hw = min(128, HW)
    assert HW % tile_hw == 0 and tile_hw % 8 == 0

    kernel = functools.partial(netsimple_kernel, inv_hw=1.0 / HW)

    grid_spec = pltpu.PrefetchScalarGridSpec(
        num_scalar_prefetch=0,
        grid=(B, HW // tile_hw),
        in_specs=[
            pl.BlockSpec((None, tile_hw, CKK), lambda b, s: (b, s, 0)),
            pl.BlockSpec((CKK, F_PAD), lambda b, s: (0, 0)),
            pl.BlockSpec((1, F_PAD), lambda b, s: (0, 0)),
            pl.BlockSpec((1, F_PAD), lambda b, s: (0, 0)),
            pl.BlockSpec((1, O_PAD), lambda b, s: (0, 0)),
        ],
        out_specs=pl.BlockSpec((None, 1, O_PAD), lambda b, s: (b, 0, 0)),
        scratch_shapes=[pltpu.VMEM((1, F_PAD), jnp.float32)],
    )

    out_pad = pl.pallas_call(
        kernel,
        out_shape=jax.ShapeDtypeStruct((B, 1, O_PAD), jnp.float32),
        grid_spec=grid_spec,
        compiler_params=pltpu.CompilerParams(
            dimension_semantics=("parallel", "arbitrary")),
    )(patches, wconv_p, bconv_p, wc_row, bc_pad)

    return out_pad[:, 0, :O]                                          # [B, O]


def init_params(key, C, F, D, O):
    """Deterministic synthetic parameters (no checkpoint load)."""
    k1, k2, k3, k4, k5, k6 = jax.random.split(key, 6)
    # conv weight [F, C, 3, 3] -> matmul layout [C*9, F]
    wconv_nchw = 0.1 * jax.random.normal(k1, (F, C, 3, 3), jnp.float32)
    wconv = wconv_nchw.reshape(F, C * 9).T                       # [C*9, F]
    bconv = 0.1 * jax.random.normal(k2, (1, F), jnp.float32)
    wfc = 0.1 * jax.random.normal(k3, (F, D), jnp.float32)
    bfc = 0.1 * jax.random.normal(k4, (1, D), jnp.float32)
    whead = 0.1 * jax.random.normal(k5, (D, O), jnp.float32)
    bhead = 0.1 * jax.random.normal(k6, (1, O), jnp.float32)
    return dict(wconv=wconv, bconv=bconv, wfc=wfc, bfc=bfc,
                whead=whead, bhead=bhead)


# pure-JAX reference (same bf16 input rounding as the kernel, f32 math)
def reference_forward(x, params):
    B, C, H, W = x.shape
    patches = im2col_3x3(x).astype(jnp.bfloat16).astype(jnp.float32)  # [B, HW, C*9]
    wconv = params["wconv"].astype(jnp.bfloat16).astype(jnp.float32)
    conv = jnp.maximum(patches @ wconv + params["bconv"], 0.0)        # [B, HW, F]
    pooled = conv.mean(axis=1)                                        # [B, F]
    feat = pooled @ params["wfc"] + params["bfc"]
    return feat @ params["whead"] + params["bhead"]


if __name__ == "__main__":
    # small shapes: batch=2, channels=4 (config.CHANNELS), spatial=16x16
    B, C, H, W = 2, 4, 16, 16
    F = 8     # synthetic backbone conv channels
    D = 32    # backbone.model.fc.out_features stand-in
    O = 1     # net_out_features

    key = jax.random.PRNGKey(0)
    kx, kp = jax.random.split(key)
    x = jax.random.normal(kx, (B, C, H, W), jnp.float32)
    params = init_params(kp, C, F, D, O)

    fwd = jax.jit(netsimple_forward)
    out = jax.block_until_ready(fwd(x, params))

    ref = reference_forward(x, params)
    assert out.shape == (B, O)
    assert jnp.allclose(out, ref, atol=2e-4, rtol=2e-4), (out, ref)

    print("KERNEL_OK")
</pallas_src>

<mosaic_0001>
module attributes {stable_mosaic.version = 11 : i64} {
  func.func @netsimple_kernel(%arg0: i32, %arg1: i32, %arg2: memref<1x128x36xbf16, #tpu.memory_space<vmem>>, %arg3: memref<36x128xbf16, #tpu.memory_space<vmem>>, %arg4: memref<1x128xf32, #tpu.memory_space<vmem>>, %arg5: memref<1x128xf32, #tpu.memory_space<vmem>>, %arg6: memref<1x128xf32, #tpu.memory_space<vmem>>, %arg7: memref<1x1x128xf32, #tpu.memory_space<vmem>>, %arg8: memref<1x128xf32, #tpu.memory_space<vmem>>) attributes {dimension_semantics = [#tpu.dimension_semantics<parallel>, #tpu.dimension_semantics<arbitrary>], iteration_bounds = array<i64: 2, 2>, scalar_prefetch = 0 : i64, scratch_operands = 1 : i64, tpu.core_type = #tpu.core_type<tc>, window_params = [{transform_indices = @transform_0, window_bounds = array<i64: 1, 128, 36>}, {pipeline_mode = #tpu.pipeline_mode<synchronous>, transform_indices = @transform_1, window_bounds = array<i64: 36, 128>}, {pipeline_mode = #tpu.pipeline_mode<synchronous>, transform_indices = @transform_2, window_bounds = array<i64: 1, 128>}, {pipeline_mode = #tpu.pipeline_mode<synchronous>, transform_indices = @transform_3, window_bounds = array<i64: 1, 128>}, {pipeline_mode = #tpu.pipeline_mode<synchronous>, transform_indices = @transform_4, window_bounds = array<i64: 1, 128>}, {transform_indices = @transform_5, window_bounds = array<i64: 1, 1, 128>}]} {
    %c0_i32 = arith.constant 0 : i32
    %0 = arith.cmpi eq, %arg1, %c0_i32 : i32
    %1 = arith.extui %0 : i1 to i32
    %c0_i32_0 = arith.constant 0 : i32
    %2 = arith.cmpi ne, %1, %c0_i32_0 : i32
    scf.if %2 {
      %cst_14 = arith.constant 0.000000e+00 : f32
      %20 = vector.broadcast %cst_14 : f32 to vector<1x128xf32>
      %c0_15 = arith.constant 0 : index
      %c0_16 = arith.constant 0 : index
      %21 = vector.load %arg8[%c0_15, %c0_16] : memref<1x128xf32, #tpu.memory_space<vmem>>, vector<1x128xf32>
      tpu.vector_store %arg8[%c0_15, %c0_16], %20 {strides = array<i32>} : memref<1x128xf32, #tpu.memory_space<vmem>>, vector<1x128xf32>,
    } else {
    }
    %c0 = arith.constant 0 : index
    %c0_1 = arith.constant 0 : index
    %c0_2 = arith.constant 0 : index
    %3 = vector.load %arg2[%c0, %c0_1, %c0_2] : memref<1x128x36xbf16, #tpu.memory_space<vmem>>, vector<1x128x36xbf16>
    %4 = vector.shape_cast %3 : vector<1x128x36xbf16> to vector<128x36xbf16>
    %c0_3 = arith.constant 0 : index
    %c0_4 = arith.constant 0 : index
    %5 = vector.load %arg3[%c0_3, %c0_4] : memref<36x128xbf16, #tpu.memory_space<vmem>>, vector<36x128xbf16>
    %cst = arith.constant dense<0.000000e+00> : vector<128x128xf32>
    %6 = tpu.matmul %4, %5, %cst {dimension_numbers = #tpu.dot_dimension_numbers<[1], [0], [0], [1], [0, 0, 1, 1], [], []>} : vector<128x36xbf16>, vector<36x128xbf16>, vector<128x128xf32> -> vector<128x128xf32>
    %c0_5 = arith.constant 0 : index
    %c0_6 = arith.constant 0 : index
    %7 = vector.load %arg4[%c0_5, %c0_6] : memref<1x128xf32, #tpu.memory_space<vmem>>, vector<1x128xf32>
    %8 = vector.broadcast %7 : vector<1x128xf32> to vector<128x128xf32>
    %9 = arith.addf %6, %8 : vector<128x128xf32>
    %cst_7 = arith.constant 0.000000e+00 : f32
    %10 = vector.broadcast %cst_7 : f32 to vector<128x128xf32>
    %11 = arith.maximumf %9, %10 : vector<128x128xf32>
    %c0_8 = arith.constant 0 : index
    %c0_9 = arith.constant 0 : index
    %12 = vector.load %arg8[%c0_8, %c0_9] : memref<1x128xf32, #tpu.memory_space<vmem>>, vector<1x128xf32>
    %cst_10 = arith.constant dense<0.000000e+00> : vector<128xf32>
    %13 = vector.multi_reduction <add>, %11, %cst_10 [0] : vector<128x128xf32> to vector<128xf32>
    %14 = vector.shape_cast %13 : vector<128xf32> to vector<1x128xf32>
    %15 = arith.addf %12, %14 : vector<1x128xf32>
    %c0_11 = arith.constant 0 : index
    %c0_12 = arith.constant 0 : index
    %16 = vector.load %arg8[%c0_11, %c0_12] : memref<1x128xf32, #tpu.memory_space<vmem>>, vector<1x128xf32>
    tpu.vector_store %arg8[%c0_11, %c0_12], %15 {strides = array<i32>} : memref<1x128xf32, #tpu.memory_space<vmem>>, vector<1x128xf32>,
    %c1_i32 = arith.constant 1 : i32
    %17 = arith.cmpi eq, %arg1, %c1_i32 : i32
    %18 = arith.extui %17 : i1 to i32
    %c0_i32_13 = arith.constant 0 : i32
    %19 = arith.cmpi ne, %18, %c0_i32_13 : i32
    scf.if %19 {
      %c0_14 = arith.constant 0 : index
      %c0_15 = arith.constant 0 : index
      %20 = vector.load %arg8[%c0_14, %c0_15] : memref<1x128xf32, #tpu.memory_space<vmem>>, vector<1x128xf32>
      %cst_16 = arith.constant 3.906250e-03 : f32
      %21 = vector.broadcast %cst_16 : f32 to vector<1x128xf32>
      %22 = arith.mulf %20, %21 : vector<1x128xf32>
      %c0_17 = arith.constant 0 : index
      %c0_18 = arith.constant 0 : index
      %23 = vector.load %arg5[%c0_17, %c0_18] : memref<1x128xf32, #tpu.memory_space<vmem>>, vector<1x128xf32>
      %24 = arith.mulf %22, %23 : vector<1x128xf32>
      %cst_19 = arith.constant dense<0.000000e+00> : vector<1xf32>
      %25 = vector.multi_reduction <add>, %24, %cst_19 [1] : vector<1x128xf32> to vector<1xf32>
      %26 = vector.shape_cast %25 : vector<1xf32> to vector<1x1xf32>
      %c0_20 = arith.constant 0 : index
      %c0_21 = arith.constant 0 : index
      %27 = vector.load %arg6[%c0_20, %c0_21] : memref<1x128xf32, #tpu.memory_space<vmem>>, vector<1x128xf32>
      %28 = vector.broadcast %26 : vector<1x1xf32> to vector<1x128xf32>
      %29 = arith.addf %28, %27 : vector<1x128xf32>
      %c0_22 = arith.constant 0 : index
      %c0_23 = arith.constant 0 : index
      %c0_24 = arith.constant 0 : index
      %30 = vector.load %arg7[%c0_22, %c0_23, %c0_24] : memref<1x1x128xf32, #tpu.memory_space<vmem>>, vector<1x1x128xf32>
      %31 = vector.shape_cast %30 : vector<1x1x128xf32> to vector<1x128xf32>
      %32 = vector.shape_cast %29 : vector<1x128xf32> to vector<1x1x128xf32>
      tpu.vector_store %arg7[%c0_22, %c0_23, %c0_24], %32 {strides = array<i32>} : memref<1x1x128xf32, #tpu.memory_space<vmem>>, vector<1x1x128xf32>,
    } else {
    }
    return
  }
  func.func @transform_0(%arg0: i32, %arg1: i32) -> (i32, i32, i32) {
    %c0_i32 = arith.constant 0 : i32
    %c0_i32_0 = arith.constant 0 : i32
    return %arg0, %arg1, %c0_i32 : i32, i32, i32
  }
  func.func @transform_1(%arg0: i32, %arg1: i32) -> (i32, i32) {
    %c0_i32 = arith.constant 0 : i32
    %c0_i32_0 = arith.constant 0 : i32
    %c0_i32_1 = arith.constant 0 : i32
    return %c0_i32, %c0_i32_0 : i32, i32
  }
  func.func @transform_2(%arg0: i32, %arg1: i32) -> (i32, i32) {
    %c0_i32 = arith.constant 0 : i32
    %c0_i32_0 = arith.constant 0 : i32
    %c0_i32_1 = arith.constant 0 : i32
    return %c0_i32, %c0_i32_0 : i32, i32
  }
  func.func @transform_3(%arg0: i32, %arg1: i32) -> (i32, i32) {
    %c0_i32 = arith.constant 0 : i32
    %c0_i32_0 = arith.constant 0 : i32
    %c0_i32_1 = arith.constant 0 : i32
    return %c0_i32, %c0_i32_0 : i32, i32
  }
  func.func @transform_4(%arg0: i32, %arg1: i32) -> (i32, i32) {
    %c0_i32 = arith.constant 0 : i32
    %c0_i32_0 = arith.constant 0 : i32
    %c0_i32_1 = arith.constant 0 : i32
    return %c0_i32, %c0_i32_0 : i32, i32
  }
  func.func @transform_5(%arg0: i32, %arg1: i32) -> (i32, i32, i32) {
    %c0_i32 = arith.constant 0 : i32
    %c0_i32_0 = arith.constant 0 : i32
    %c0_i32_1 = arith.constant 0 : i32
    return %arg0, %c0_i32, %c0_i32_0 : i32, i32, i32
  }
}

</mosaic_0001>

<llo_original>
// kernel: netsimple_forward.1
$region0: #{netsimple_forward.1}
  #allocation0 [shape = 'u32[]', space=smem, size = 0x4, offset = 0x4, fixed_abs, tag = 'smem constant byte address 0x4 - core index']
  #allocation1 [shape = 'u32[144,128]{1,0:T(1,128)}', space=vmem, size = 0x12000, scoped, tag = 'internal scratch']
  #allocation2 [shape = 'f32[1,128]{1,0:T(1,128)}', space=vmem, size = 0x200, scoped, tag = 'scratch operand']
  %s0 = inlined_call_operand.vmem [shape: bf16[2,256,36], index: 0, kind: input, shape index: {}]
  %s1 = inlined_call_operand.vmem [shape: bf16[36,128], index: 1, kind: input, shape index: {}]
  %s2 = inlined_call_operand.vmem [shape: f32[1,128], index: 2, kind: input, shape index: {}]
  %s3 = inlined_call_operand.vmem [shape: f32[1,128], index: 3, kind: input, shape index: {}]
  %s4 = inlined_call_operand.vmem [shape: f32[1,128], index: 4, kind: input, shape index: {}]
  %s5 = inlined_call_operand.vmem [shape: f32[2,1,128], index: 5, kind: output, shape index: {}]
  %s6 = sld [smem:[#allocation0]]
  $region61: #{netsimple_forward.1} parent=0
    _
  %s8 = ssub.s32 1, %s6
  %s9 = scalar_select 0, %s8, %s6
  loop: start=0, step=1, limit=6
  $region2: #{netsimple_forward.1} parent=0 // loop_pre_header
    _
  $region3: #{netsimple_forward.1} parent=0 // loop_header
    %s11 = sphi 0, %s15
    %p12 = scmp.ge.s32.totalorder %s11, 6
    %s18 = sphi 0, %s30
    %s19 = sphi 0, %s26
    %s20 = sphi 0, %s18
    %s21 = sphi 0, %s19
    %s22 = sphi 0, %s20
    %s23 = sphi 0, %s21
    %s35 = sphi 0, %s37
    %s38 = sphi 0, %s35
    %s39 = sphi 0, %s38
    %s55 = sphi 0, %s39
    %s59 = sphi 0, %s59
    %s61 = sphi 0, %s59
    %s62 = sphi 0, %s61
    %s76 = sphi 0, %s62
    %s80 = sphi 0, %s80
    %s82 = sphi 0, %s80
    %s83 = sphi 0, %s82
    %s97 = sphi 0, %s83
    %s101 = sphi 0, %s101
    %s103 = sphi 0, %s101
    %s104 = sphi 0, %s103
    %s118 = sphi 0, %s104
    %s122 = sphi 0, %s122
    %s124 = sphi 0, %s122
    %s125 = sphi 0, %s124
    %s139 = sphi 0, %s125
    %s145 = sphi 0, %s147
    %s148 = sphi 0, %s145
    %s149 = sphi 0, %s148
    %s165 = sphi 0, %s149
  $region4: #{netsimple_forward.1} parent=0 // loop_header_branch
    %14 = sbr.rel (%p12) target = $region8
  $region5: #{netsimple_forward.1} parent=0 // loop_body
    %s16 = ssub.s32 %s11, 1
    %s17 = ssub.s32 %s11, 2
    %s24 = sadd.s32 1, %s19
    %p25 = scmp.ge.s32.totalorder %s24, 2
    %s26 = scalar_select %p25, 0, %s24
    %s27 = sadd.s32 1, %s18
    %s28 = scalar_select %p25, %s27, %s18
    %p29 = scmp.ge.s32.totalorder %s28, 2
    %s30 = scalar_select %p29, 0, %s28
    %s31 = ssub.s32 %s18, %s30
    %s32 = ssub.s32 %s19, %s26
    %s33 = sor.u32 %s31, %s32
    %p34 = scmp.eq.s32.totalorder %s33, 0
    %s36 = sadd.s32 %s35, 1
    %s37 = scalar_select %p34, %s35, %s36
    %p40 = pneg %p34
    %p41 = scmp.eq.s32.totalorder %s11, 3
    %p42 = por %p40, %p41
    %p43 = scmp.ne.s32.totalorder %s35, %s38
    %p44 = scmp.eq.s32.totalorder %s11, 0
    %p45 = por %p43, %p44
    %p46 = scmp.ne.s32.totalorder %s35, %s38
    %p47 = scmp.eq.s32.totalorder %s16, 3
    %p48 = por %p46, %p47
    %p49 = scmp.ne.s32.totalorder %s38, %s39
    %p50 = scmp.eq.s32.totalorder %s16, 0
    %p51 = por %p49, %p50
    %p52 = scmp.ne.s32.totalorder %s38, %s39
    %p53 = scmp.eq.s32.totalorder %s17, 3
    %p54 = por %p52, %p53
    %p56 = scmp.ne.s32.totalorder %s39, %s55
    %p57 = scmp.eq.s32.totalorder %s17, 0
    %p58 = por %p56, %p57
    %s60 = sadd.s32 %s59, 1
    %p63 = scmp.eq.s32.totalorder %s11, 3
    %p64 = scmp.ne.s32.totalorder %s59, %s61
    %p65 = scmp.eq.s32.totalorder %s11, 0
    %p66 = por %p64, %p65
    %p67 = scmp.ne.s32.totalorder %s59, %s61
    %p68 = scmp.eq.s32.totalorder %s16, 3
    %p69 = por %p67, %p68
    %p70 = scmp.ne.s32.totalorder %s61, %s62
    %p71 = scmp.eq.s32.totalorder %s16, 0
    %p72 = por %p70, %p71
    %p73 = scmp.ne.s32.totalorder %s61, %s62
    %p74 = scmp.eq.s32.totalorder %s17, 3
    %p75 = por %p73, %p74
    %p77 = scmp.ne.s32.totalorder %s62, %s76
    %p78 = scmp.eq.s32.totalorder %s17, 0
    %p79 = por %p77, %p78
    %s81 = sadd.s32 %s80, 1
    %p84 = scmp.eq.s32.totalorder %s11, 3
    %p85 = scmp.ne.s32.totalorder %s80, %s82
    %p86 = scmp.eq.s32.totalorder %s11, 0
    %p87 = por %p85, %p86
    %p88 = scmp.ne.s32.totalorder %s80, %s82
    %p89 = scmp.eq.s32.totalorder %s16, 3
    %p90 = por %p88, %p89
    %p91 = scmp.ne.s32.totalorder %s82, %s83
    %p92 = scmp.eq.s32.totalorder %s16, 0
    %p93 = por %p91, %p92
    %p94 = scmp.ne.s32.totalorder %s82, %s83
    %p95 = scmp.eq.s32.totalorder %s17, 3
    %p96 = por %p94, %p95
    %p98 = scmp.ne.s32.totalorder %s83, %s97
    %p99 = scmp.eq.s32.totalorder %s17, 0
    %p100 = por %p98, %p99
    %s102 = sadd.s32 %s101, 1
    %p105 = scmp.eq.s32.totalorder %s11, 3
    %p106 = scmp.ne.s32.totalorder %s101, %s103
    %p107 = scmp.eq.s32.totalorder %s11, 0
    %p108 = por %p106, %p107
    %p109 = scmp.ne.s32.totalorder %s101, %s103
    %p110 = scmp.eq.s32.totalorder %s16, 3
    %p111 = por %p109, %p110
    %p112 = scmp.ne.s32.totalorder %s103, %s104
    %p113 = scmp.eq.s32.totalorder %s16, 0
    %p114 = por %p112, %p113
    %p115 = scmp.ne.s32.totalorder %s103, %s104
    %p116 = scmp.eq.s32.totalorder %s17, 3
    %p117 = por %p115, %p116
    %p119 = scmp.ne.s32.totalorder %s104, %s118
    %p120 = scmp.eq.s32.totalorder %s17, 0
    %p121 = por %p119, %p120
    %s123 = sadd.s32 %s122, 1
    %p126 = scmp.eq.s32.totalorder %s11, 3
    %p127 = scmp.ne.s32.totalorder %s122, %s124
    %p128 = scmp.eq.s32.totalorder %s11, 0
    %p129 = por %p127, %p128
    %p130 = scmp.ne.s32.totalorder %s122, %s124
    %p131 = scmp.eq.s32.totalorder %s16, 3
    %p132 = por %p130, %p131
    %p133 = scmp.ne.s32.totalorder %s124, %s125
    %p134 = scmp.eq.s32.totalorder %s16, 0
    %p135 = por %p133, %p134
    %p136 = scmp.ne.s32.totalorder %s124, %s125
    %p137 = scmp.eq.s32.totalorder %s17, 3
    %p138 = por %p136, %p137
    %p140 = scmp.ne.s32.totalorder %s125, %s139
    %p141 = scmp.eq.s32.totalorder %s17, 0
    %p142 = por %p140, %p141
    %s143 = ssub.s32 %s18, %s30
    %p144 = scmp.eq.s32.totalorder %s143, 0
    %s146 = sadd.s32 %s145, 1
    %s147 = scalar_select %p144, %s145, %s146
    %p150 = pneg %p144
    %p151 = scmp.eq.s32.totalorder %s11, 3
    %p152 = por %p150, %p151
    %p153 = scmp.ne.s32.totalorder %s145, %s148
    %p154 = scmp.eq.s32.totalorder %s11, 0
    %p155 = por %p153, %p154
    %p156 = scmp.ne.s32.totalorder %s145, %s148
    %p157 = scmp.eq.s32.totalorder %s16, 3
    %p158 = por %p156, %p157
    %p159 = scmp.ne.s32.totalorder %s148, %s149
    %p160 = scmp.eq.s32.totalorder %s16, 0
    %p161 = por %p159, %p160
    %p162 = scmp.ne.s32.totalorder %s148, %s149
    %p163 = scmp.eq.s32.totalorder %s17, 3
    %p164 = por %p162, %p163
    %p166 = scmp.ne.s32.totalorder %s149, %s165
    %p167 = scmp.eq.s32.totalorder %s17, 0
    %p168 = por %p166, %p167
    %p169 = scmp.le.s32.totalorder 1, %s11
    %p170 = scmp.lt.s32.totalorder %s11, 5
    %p171 = pnand %p169, %p170
    %p172 = pneg %p171
    // Predicated region
    $region9: #{netsimple_forward.1} parent=5 // pred_check
      _
    $region10: #{netsimple_forward.1} parent=5 // pred_check_branch
      %174 = sbr.rel (%p171) target = $region12
    $region11: #{netsimple_forward.1} parent=5 // pred_region
      %s175 = ssub.s32 %s11, 1
      // Predicated region
      $region13: #{netsimple_forward.1} parent=11 // pred_check
        %p176 = pneg %p72
      $region14: #{netsimple_forward.1} parent=11 // pred_check_branch
        %178 = sbr.rel (%p176) target = $region16
      $region15: #{netsimple_forward.1} parent=11 // pred_region
        _
      $region16: #{netsimple_forward.1} parent=11 // pred_fallthru
        _
      // Predicated region
      $region17: #{netsimple_forward.1} parent=11 // pred_check
        %p179 = pneg %p93
      $region18: #{netsimple_forward.1} parent=11 // pred_check_branch
        %181 = sbr.rel (%p179) target = $region20
      $region19: #{netsimple_forward.1} parent=11 // pred_region
        _
      $region20: #{netsimple_forward.1} parent=11 // pred_fallthru
        _
      // Predicated region
      $region21: #{netsimple_forward.1} parent=11 // pred_check
        %p182 = pneg %p114
      $region22: #{netsimple_forward.1} parent=11 // pred_check_branch
        %184 = sbr.rel (%p182) target = $region24
      $region23: #{netsimple_forward.1} parent=11 // pred_region
        _
      $region24: #{netsimple_forward.1} parent=11 // pred_fallthru
        _
      // Predicated region
      $region25: #{netsimple_forward.1} parent=11 // pred_check
        %p185 = pneg %p135
      $region26: #{netsimple_forward.1} parent=11 // pred_check_branch
        %187 = sbr.rel (%p185) target = $region28
      $region27: #{netsimple_forward.1} parent=11 // pred_region
        _
      $region28: #{netsimple_forward.1} parent=11 // pred_fallthru
        _
    $region12: #{netsimple_forward.1} parent=5 // pred_fallthru
      _
    %p188 = scmp.lt.s32.totalorder %s11, 4
    // Predicated region
    $region29: #{netsimple_forward.1} parent=5 // pred_check
      %p189 = pneg %p188
    $region30: #{netsimple_forward.1} parent=5 // pred_check_branch
      %191 = sbr.rel (%p189) target = $region32
    $region31: #{netsimple_forward.1} parent=5 // pred_region
      // Predicated region
      $region33: #{netsimple_forward.1} parent=31 // pred_check
        %p192 = pneg %p45
      $region34: #{netsimple_forward.1} parent=31 // pred_check_branch
        %194 = sbr.rel (%p192) target = $region36
      $region35: #{netsimple_forward.1} parent=31 // pred_region
        %s195 = smul.u32 16, %s19
        %p196 = scmp.lt.s32.totalorder %s18, 1
        %s197 = scalar_select %p196, %s18, 1
        %p198 = scmp.lt.s32.totalorder %s195, 31
        %s199 = scalar_select %p198, %s195, 31
        %s200 = smul.addr %s197, 32
        %s201 = sadd.s32 %s199, %s200
        %s202 = smul.addr %s201, 4
        %s203 = scalar_lea.vmem %s0, %s202
        %s204 = smul.u32 16, %s19
      $region36: #{netsimple_forward.1} parent=31 // pred_fallthru
        _
    $region32: #{netsimple_forward.1} parent=5 // pred_fallthru
      _
    %p205 = scmp.le.s32.totalorder 1, %s11
    %p206 = scmp.lt.s32.totalorder %s11, 5
    %p207 = pnand %p205, %p206
    %p208 = pneg %p207
    // Predicated region
    $region37: #{netsimple_forward.1} parent=5 // pred_check
      _
    $region38: #{netsimple_forward.1} parent=5 // pred_check_branch
      %210 = sbr.rel (%p207) target = $region40
    $region39: #{netsimple_forward.1} parent=5 // pred_region
      %s211 = ssub.s32 %s11, 1
      %s212 = smul.u32 16, %s21
      %p213 = scmp.lt.s32.totalorder %s20, 1
      %s214 = scalar_select %p213, %s20, 1
      %p215 = scmp.lt.s32.totalorder %s212, 31
      %s216 = scalar_select %p215, %s212, 31
      %s217 = smul.addr %s214, 32
      %s218 = sadd.s32 %s216, %s217
      %s219 = smul.addr %s218, 4
      %s220 = scalar_lea.vmem %s0, %s219
      %p221 = pneg %p51
      %p222 = pneg %p48
      %p223 = pneg %p72
      %p224 = pneg %p69
      %p225 = pneg %p93
      %p226 = pneg %p90
      %p227 = pneg %p114
      %p228 = pneg %p111
      %p229 = pneg %p135
      %p230 = pneg %p132
      %p231 = pneg %p161
      %p232 = pneg %p158
      %p233 = scmp.lt.s32.totalorder %s20, 1
      %s234 = scalar_select %p233, %s20, 1
      %s235 = scalar_lea.vmem %s5, %s234
      %s236 = smul.u32 16, %s21
      %p237 = scmp.lt.s32.totalorder %s20, 1
      %s238 = scalar_select %p237, %s20, 1
      %p239 = scmp.lt.s32.totalorder %s236, 31
      %s240 = scalar_select %p239, %s236, 31
      %s241 = smul.addr %s238, 32
      %s242 = sadd.s32 %s240, %s241
      %s243 = smul.addr %s242, 4
      %s244 = scalar_lea.vmem %s0, %s243
      %s245 = smul.u32 16, %s21
      %p246 = scmp.lt.s32.totalorder %s20, 1
      %s247 = scalar_select %p246, %s20, 1
      %s248 = scalar_lea.vmem %s5, %s247
      %p250 = scmp.eq.s32.totalorder %s21, 0
      // Predicated region
      $region41: #{netsimple_forward.1} parent=39 // pred_check
        %p251 = pneg %p250
      $region42: #{netsimple_forward.1} parent=39 // pred_check_branch
        %253 = sbr.rel (%p251) target = $region44
      $region43: #{netsimple_forward.1} parent=39 // pred_region
        %254 = vst [vmem:[#allocation2] sm:$0x1] 0.0
      $region44: #{netsimple_forward.1} parent=39 // pred_fallthru
        _
      %v255 = vld [vmem:[%s244] sm:$0xf]
      %v256 = vld [vmem:[%s244 + $0x4] sm:$0xf]
      %v257 = vld [vmem:[%s244 + $0x8] sm:$0xf]
      %v258 = vld [vmem:[%s244 + $0xc] sm:$0xf]
      %v259 = vld [vmem:[%s244 + $0x10] sm:$0xf]
      %v260 = vld [vmem:[%s244 + $0x14] sm:$0xf]
      %v261 = vld [vmem:[%s244 + $0x18] sm:$0xf]
      %v262 = vld [vmem:[%s244 + $0x1c] sm:$0xf]
      %v263 = vld [vmem:[%s244 + $0x20] sm:$0xf]
      %v264 = vld [vmem:[%s244 + $0x24] sm:$0xf]
      %v265 = vld [vmem:[%s244 + $0x28] sm:$0xf]
      %v266 = vld [vmem:[%s244 + $0x2c] sm:$0xf]
      %v267 = vld [vmem:[%s244 + $0x30] sm:$0xf]
      %v268 = vld [vmem:[%s244 + $0x34] sm:$0xf]
      %v269 = vld [vmem:[%s244 + $0x38] sm:$0xf]
      %v270 = vld [vmem:[%s244 + $0x3c] sm:$0xf]
      %v271 = vld [vmem:[%s1] sm:$0xf]
      %v272 = vld [vmem:[%s1 + $0x4] sm:$0xf]
      %v273 = vld [vmem:[%s1 + $0x8] sm:$0xf]
      %v274 = vld [vmem:[%s1 + $0xc] sm:$0xf]
      %v275 = vld [vmem:[%s1 + $0x10] sm:$0x3]
      %v276 = vld [vmem:[%s2] sm:$0x1]
      %v278 = vlaneseq
      %v279 = vshrl.u32 %v278, 7
      %v280 = vsub.s32 0, %v279
      %v281 = vrot.slane %v276, %v280
      %v299 = vunpack.c.l.b16 %v255
      %v300 = vunpack.c.l.b16 %v256
      %v301 = vunpack.c.l.b16 %v257
      %v302 = vunpack.c.l.b16 %v258
      %v303 = vunpack.c.l.b16 %v259
      %v304 = vunpack.c.l.b16 %v260
      %v305 = vunpack.c.l.b16 %v261
      %v306 = vunpack.c.l.b16 %v262
      %v307 = vunpack.c.l.b16 %v263
      %v308 = vunpack.c.l.b16 %v264
      %v309 = vunpack.c.l.b16 %v265
      %v310 = vunpack.c.l.b16 %v266
      %v311 = vunpack.c.l.b16 %v267
      %v312 = vunpack.c.l.b16 %v268
      %v313 = vunpack.c.l.b16 %v269
      %v314 = vunpack.c.l.b16 %v270
      %v315 = vpack.c.b16 %v300, %v299
      %v316 = vpack.c.b16 %v302, %v301
      %v317 = vpack.c.b16 %v304, %v303
      %v318 = vpack.c.b16 %v306, %v305
      %v319 = vpack.c.b16 %v308, %v307
      %v320 = vpack.c.b16 %v310, %v309
      %v321 = vpack.c.b16 %v312, %v311
      %v322 = vpack.c.b16 %v314, %v313
      %v328 = vunpack.c.l.b16 %v271
      %v329 = vunpack.c.l.b16 %v272
      %v330 = vunpack.c.l.b16 %v273
      %v331 = vunpack.c.l.b16 %v274
      %v332 = vunpack.c.l.b16 %v275
      %v333 = vpack.c.b16 %v329, %v328
      %v334 = vpack.c.b16 %v331, %v330
      %v335 = vpack.c.b16 %v332, %v332
      %vm338 = vcmask 293888
      %v340 = vsel %vm338, %v315, 0
      %v343 = vsel %vm338, %v316, 0
      %v346 = vsel %vm338, %v317, 0
      %v349 = vsel %vm338, %v318, 0
      %v352 = vsel %vm338, %v319, 0
      %v355 = vsel %vm338, %v320, 0
      %v358 = vsel %vm338, %v321, 0
      %v361 = vsel %vm338, %v322, 0
      %vm363 = vcmask 1041408
      %v365 = vsel %vm363, %v335, 0
      %367 = vmatprep.subr.bf16.mxu0 0
      %368 = vmatpush1.bf16.msra.mxu0 %v333
      %369 = vmatprep.subr.bf16.mxu0 0
      %370 = vmatpush1.bf16.msra.mxu0 %v334
      %371 = vmatprep.subr.bf16.mxu0 0
      %372 = vmatpush1.bf16.msra.mxu0 %v365
      %373 = vmatprep.subr.bf16.mxu0 0
      %374 = vmatpush1.bf16.msra.mxu0 0
      %375 = vmatprep.subr.bf16.mxu0 0
      %376 = vmatpush1.bf16.msra.mxu0 0
      %377 = vmatprep.subr.bf16.mxu0 0
      %378 = vmatpush1.bf16.msra.mxu0 0
      %379 = vmatprep.subr.bf16.mxu0 0
      %380 = vmatpush1.bf16.msra.mxu0 0
      %381 = vmatprep.subr.bf16.mxu0 0
      %382 = vmatpush1.bf16.msra.mxu0 0
      %383 = vmatprep.subr.bf16.mxu0 0
      %384 = vmatpush1.bf16.msra.mxu0 0
      %385 = vmatprep.subr.bf16.mxu0 0
      %386 = vmatpush1.bf16.msra.mxu0 0
      %387 = vmatprep.subr.bf16.mxu0 0
      %388 = vmatpush1.bf16.msra.mxu0 0
      %389 = vmatprep.subr.bf16.mxu0 0
      %390 = vmatpush1.bf16.msra.mxu0 0
      %391 = vmatprep.subr.bf16.mxu0 0
      %392 = vmatpush1.bf16.msra.mxu0 0
      %393 = vmatprep.subr.bf16.mxu0 0
      %394 = vmatpush1.bf16.msra.mxu0 0
      %395 = vmatprep.subr.bf16.mxu0 0
      %396 = vmatpush1.bf16.msra.mxu0 0
      %397 = vmatprep.subr.bf16.mxu0 0
      %398 = vmatpush1.bf16.msra.mxu0 0
      %399 = vmatprep.mubr.bf16.mxu0 0
      %400 = vmatmul.mubr.bf16.gmra.mrb[0].mxu0 %v340
      %v401 = vpop.f32.mrb[0].mxu0
      %v402 = vadd.f32 %v281, %v401
      %v403 = vpop.f32.mrb[0].mxu0
      %v404 = vpop.f32.mrb[0].mxu0
      %v405 = vadd.f32 %v281, %v404
      %v406 = vpop.f32.mrb[0].mxu0
      %407 = vmatprep.mubr.bf16.mxu0 0
      %408 = vmatmul.mubr.bf16.gmra.mrb[0].mxu0 %v343
      %v409 = vpop.f32.mrb[0].mxu0
      %v410 = vadd.f32 %v281, %v409
      %v411 = vpop.f32.mrb[0].mxu0
      %v412 = vpop.f32.mrb[0].mxu0
      %v413 = vadd.f32 %v281, %v412
      %v414 = vpop.f32.mrb[0].mxu0
      %415 = vmatprep.mubr.bf16.mxu0 0
      %416 = vmatmul.mubr.bf16.gmra.mrb[0].mxu0 %v346
      %v417 = vpop.f32.mrb[0].mxu0
      %v418 = vadd.f32 %v281, %v417
      %v419 = vpop.f32.mrb[0].mxu0
      %v420 = vpop.f32.mrb[0].mxu0
      %v421 = vadd.f32 %v281, %v420
      %v422 = vpop.f32.mrb[0].mxu0
      %423 = vmatprep.mubr.bf16.mxu0 0
      %424 = vmatmul.mubr.bf16.gmra.mrb[0].mxu0 %v349
      %v425 = vpop.f32.mrb[0].mxu0
      %v426 = vadd.f32 %v281, %v425
      %v427 = vpop.f32.mrb[0].mxu0
      %v428 = vpop.f32.mrb[0].mxu0
      %v429 = vadd.f32 %v281, %v428
      %v430 = vpop.f32.mrb[0].mxu0
      %431 = vmatprep.mubr.bf16.mxu0 0
      %432 = vmatmul.mubr.bf16.gmra.mrb[0].mxu0 %v352
      %v433 = vpop.f32.mrb[0].mxu0
      %v434 = vadd.f32 %v281, %v433
      %v435 = vpop.f32.mrb[0].mxu0
      %v436 = vpop.f32.mrb[0].mxu0
      %v437 = vadd.f32 %v281, %v436
      %v438 = vpop.f32.mrb[0].mxu0
      %439 = vmatprep.mubr.bf16.mxu0 0
      %440 = vmatmul.mubr.bf16.gmra.mrb[0].mxu0 %v355
      %v441 = vpop.f32.mrb[0].mxu0
      %v442 = vadd.f32 %v281, %v441
      %v443 = vpop.f32.mrb[0].mxu0
      %v444 = vpop.f32.mrb[0].mxu0
      %v445 = vadd.f32 %v281, %v444
      %v446 = vpop.f32.mrb[0].mxu0
      %447 = vmatprep.mubr.bf16.mxu0 0
      %448 = vmatmul.mubr.bf16.gmra.mrb[0].mxu0 %v358
      %v449 = vpop.f32.mrb[0].mxu0
      %v450 = vadd.f32 %v281, %v449
      %v451 = vpop.f32.mrb[0].mxu0
      %v452 = vpop.f32.mrb[0].mxu0
      %v453 = vadd.f32 %v281, %v452
      %v454 = vpop.f32.mrb[0].mxu0
      %455 = vmatprep.mubr.bf16.mxu0 0
      %456 = vmatmul.mubr.bf16.gmra.mrb[0].mxu0 %v361
      %v457 = vpop.f32.mrb[0].mxu0
      %v458 = vadd.f32 %v281, %v457
      %v459 = vpop.f32.mrb[0].mxu0
      %v460 = vpop.f32.mrb[0].mxu0
      %v461 = vadd.f32 %v281, %v460
      %v462 = vpop.f32.mrb[0].mxu0
      %463 = vdwg.mxu0
      %v464 = vmax.f32 %v402, 0.0
      %v465 = vmax.f32 %v405, 0.0
      %v466 = vmax.f32 %v410, 0.0
      %v467 = vmax.f32 %v413, 0.0
      %v468 = vmax.f32 %v418, 0.0
      %v469 = vmax.f32 %v421, 0.0
      %v470 = vmax.f32 %v426, 0.0
      %v471 = vmax.f32 %v429, 0.0
      %v472 = vmax.f32 %v434, 0.0
      %v473 = vmax.f32 %v437, 0.0
      %v474 = vmax.f32 %v442, 0.0
      %v475 = vmax.f32 %v445, 0.0
      %v476 = vmax.f32 %v450, 0.0
      %v477 = vmax.f32 %v453, 0.0
      %v478 = vmax.f32 %v458, 0.0
      %v479 = vmax.f32 %v461, 0.0
      %v480 = vld [vmem:[#allocation2] sm:$0x1]
      %v481 = vadd.f32 %v464, %v465
      %v482 = vadd.f32 %v481, %v466
      %v483 = vadd.f32 %v482, %v467
      %v484 = vadd.f32 %v483, %v468
      %v485 = vadd.f32 %v484, %v469
      %v486 = vadd.f32 %v485, %v470
      %v487 = vadd.f32 %v486, %v471
      %v488 = vadd.f32 %v487, %v472
      %v489 = vadd.f32 %v488, %v473
      %v490 = vadd.f32 %v489, %v474
      %v491 = vadd.f32 %v490, %v475
      %v492 = vadd.f32 %v491, %v476
      %v493 = vadd.f32 %v492, %v477
      %v494 = vadd.f32 %v493, %v478
      %v495 = vadd.f32 %v494, %v479
      %v496 = vrot.slane %v495, 4
      %v497 = vadd.f32 %v495, %v496
      %v498 = vrot.slane %v497, 2
      %v499 = vadd.f32 %v497, %v498
      %v500 = vrot.slane %v499, 1
      %v501 = vadd.f32 %v499, %v500
      %v502 = vadd.f32 %v480, %v501
      %503 = vst [vmem:[#allocation2] sm:$0x1] %v502
      %p504 = scmp.eq.s32.totalorder %s21, 1
      // Predicated region
      $region45: #{netsimple_forward.1} parent=39 // pred_check
        %p505 = pneg %p504
      $region46: #{netsimple_forward.1} parent=39 // pred_check_branch
        %507 = sbr.rel (%p505) target = $region48
      $region47: #{netsimple_forward.1} parent=39 // pred_region
        %v508 = vld [vmem:[#allocation2] sm:$0x1]
        %v509 = vmul.f32 %v508, 0.00390625
        %v510 = vld [vmem:[%s3] sm:$0x1]
        %v511 = vmul.f32 %v509, %v510
        %vm512 = vcmask 1040384
        %v513 = vsel %vm512, %v511, 0.0
        %514 = vadd.xlane.f32.xlu0 %v513
        %v515 = vpop.xlane.xlu0 %514
        %v516 = vld [vmem:[%s4] sm:$0x1]
        %v517 = vadd.f32 %v515, %v516
        %518 = vst [vmem:[%s248] sm:$0x1] %v517
      $region48: #{netsimple_forward.1} parent=39 // pred_fallthru
        _
      %p519 = scmp.lt.s32.totalorder %s20, 1
      %s520 = scalar_select %p519, %s20, 1
      %s521 = scalar_lea.vmem %s5, %s520
      // Predicated region
      $region49: #{netsimple_forward.1} parent=39 // pred_check
        %p522 = pneg %p158
      $region50: #{netsimple_forward.1} parent=39 // pred_check_branch
        %524 = sbr.rel (%p522) target = $region52
      $region51: #{netsimple_forward.1} parent=39 // pred_region
        _
      $region52: #{netsimple_forward.1} parent=39 // pred_fallthru
        _
    $region40: #{netsimple_forward.1} parent=5 // pred_fallthru
      _
    %p525 = scmp.le.s32.totalorder 2, %s11
    // Predicated region
    $region53: #{netsimple_forward.1} parent=5 // pred_check
      %p526 = pneg %p525
    $region54: #{netsimple_forward.1} parent=5 // pred_check_branch
      %528 = sbr.rel (%p526) target = $region56
    $region55: #{netsimple_forward.1} parent=5 // pred_region
      %s529 = ssub.s32 %s11, 2
      // Predicated region
      $region57: #{netsimple_forward.1} parent=55 // pred_check
        %p530 = pneg %p164
      $region58: #{netsimple_forward.1} parent=55 // pred_check_branch
        %532 = sbr.rel (%p530) target = $region60
      $region59: #{netsimple_forward.1} parent=55 // pred_region
        %p533 = scmp.lt.s32.totalorder %s22, 1
        %s534 = scalar_select %p533, %s22, 1
        %s535 = scalar_lea.vmem %s5, %s534
      $region60: #{netsimple_forward.1} parent=55 // pred_fallthru
        _
    $region56: #{netsimple_forward.1} parent=5 // pred_fallthru
      _
  $region6: #{netsimple_forward.1} parent=0 // loop_footer
    %s15 = sadd.s32 1, %s11
  $region7: #{netsimple_forward.1} parent=0 // loop_footer_branch
    %10 = sbr.rel target = $region3
  $region8: #{netsimple_forward.1} parent=0 // loop_exit
    _

</llo_original>
